<compile_context>
chip_gen: v6e
topology: v6e:2x2x1
jax: 0.10.0
libtpu: 0.0.40
codegen_flags: <defaults>
</compile_context>

<pallas_src>
import jax
import jax.numpy as jnp
import numpy as np
from jax.experimental import pallas as pl
from jax.experimental.pallas import tpu as pltpu  # noqa: F401  (kept for TODO path)


def cross_attn_kernel(text_ref, img_ref, wqk_ref, bqk_ref, wvo_ref, bvo_ref,
                      y_ref):
    t = text_ref[...]                              # [B, T]
    x = img_ref[...]                               # [B, C, HW] (native NCHW, HW on lanes)

    # Fused query+key projection (Wqk = Wq Wk^T / sqrt(E), bqk = bq Wk^T / sqrt(E)).
    # bk only shifts every logit by a per-batch constant -> softmax-invariant, dropped.
    qk = (jnp.dot(t, wqk_ref[...], preferred_element_type=jnp.float32)
          + bqk_ref[...])                          # [B, C]

    # Attention logits over spatial positions, on the MXU:
    # s[b, 1, h] = sum_c qk[b, c] * x[b, c, h]
    s = jnp.einsum("bqc,bch->bqh", qk[:, None, :], x,
                   preferred_element_type=jnp.float32)        # [B, 1, HW]

    # Softmax over HW; normalization deferred to the small [B, C] result below.
    s = s - jnp.max(s, axis=-1, keepdims=True)
    p = jnp.exp(s)                                            # [B, 1, HW] (unnormalized)
    l = jnp.sum(p, axis=-1, keepdims=True)                    # [B, 1, 1]

    # attn @ x on the MXU (same contraction pattern as flash 'bqd,bkd->bqk').
    px = jnp.einsum("bqh,bch->bqc", p, x,
                    preferred_element_type=jnp.float32)       # [B, 1, C]
    # approx=True would use the free EUP slot, but perturbs the 1e-5 parity
    # check; this is O(B) scalars so exact is effectively free.
    px = px[:, 0, :] * pl.reciprocal(l[:, 0, :], approx=False)  # [B, C]

    # Fused value+output projection (Wvo = Wv Wo, bvo = bv Wo + bo); bv passes
    # through unchanged because the softmax weights sum to 1.
    y_ref[...] = (jnp.dot(px, wvo_ref[...], preferred_element_type=jnp.float32)
                  + bvo_ref[...])                             # [B, C]


def cross_attention_block(text, image_nchw, params):
    """text: [B, T] float32, image_nchw: [B, C, H, W] float32 -> [B, C, H, W]."""
    B, C, H, W = image_nchw.shape
    E = params["wq"].shape[1]
    scale = 1.0 / jnp.sqrt(jnp.float32(E))

    # Fold the two projection chains once in the wrapper (tiny [T,C]/[C,C] mats,
    # computed by XLA outside the kernel).
    wkT = jnp.transpose(params["wk"])                                  # [E, C]
    wqk = (params["wq"] @ wkT) * scale                                 # [T, C]
    bqk = ((params["bq"] @ wkT) * scale).reshape(1, C)                 # [1, C]
    wvo = params["wv"] @ params["wo"]                                  # [C, C]
    bvo = (params["bv"] @ params["wo"] + params["bo"]).reshape(1, C)   # [1, C]

    # Native NCHW: [B, C, H, W] -> [B, C, HW] is a pure reshape (no transpose).
    img = image_nchw.reshape(B, C, H * W)

    # Single invocation, whole-array VMEM blocks: at this shape per-grid-step
    # overhead (~0.35 us) rivals the compute, and the footprint is < 64 KiB so
    # the default scoped VMEM limit is ample on v5e/v6e/v7x.
    # TODO(synk): for production image sizes, tile HW as a trailing "arbitrary"
    # grid axis (lane-dense tile >= 2048) with online-softmax carry (m, l, acc)
    # in VMEM scratch + pl.when init/finalize, add a "parallel" batch axis so
    # v7x's two TensorCores split batches, and move the image path to bf16
    # (f32 accumulation) once the 1e-5 parity gate is relaxed.
    y = pl.pallas_call(
        cross_attn_kernel,
        out_shape=jax.ShapeDtypeStruct((B, C), jnp.float32),
    )(text, img, wqk, bqk, wvo, bvo)

    # Residual broadcast add stays in XLA (one fused elementwise pass); the
    # kernel never reads back or writes the full B*HW*C image.
    return image_nchw + y[:, :, None, None]


def reference_forward(text, image_nchw, params):
    """Pure-JAX reference mirroring the PyTorch forward (includes bk)."""
    B, C, H, W = image_nchw.shape
    E = params["wq"].shape[1]
    q = text @ params["wq"] + params["bq"]                       # [B, E]
    img = image_nchw.reshape(B, C, H * W)                        # [B, C, HW]
    k = jnp.einsum("ce,bcs->bes", params["wk"], img) + params["bk"][None, :, None]
    v = jnp.einsum("ce,bcs->bes", params["wv"], img) + params["bv"][None, :, None]
    attn = jnp.einsum("be,bes->bs", q, k) / jnp.sqrt(jnp.float32(E))
    attn = jax.nn.softmax(attn, axis=-1)                         # [B, HW]
    o = jnp.einsum("bs,bes->be", attn, v)                        # [B, E]
    y = jnp.einsum("ec,be->bc", params["wo"], o) + params["bo"]  # [B, C]
    return image_nchw + y[:, :, None, None]


if __name__ == "__main__":
    # Small shapes consistent with the module's forward semantics.
    B, text_dim, img_dim, embed_dim, H, W = 2, 64, 32, 32, 8, 8

    key = jax.random.PRNGKey(0)
    ks = jax.random.split(key, 10)

    # Deterministic synthetic parameters (stored pre-transposed for x @ W).
    params = {
        "wq": 0.05 * jax.random.normal(ks[0], (text_dim, embed_dim), jnp.float32),
        "bq": 0.05 * jax.random.normal(ks[1], (embed_dim,), jnp.float32),
        "wk": 0.05 * jax.random.normal(ks[2], (img_dim, embed_dim), jnp.float32),
        "bk": 0.05 * jax.random.normal(ks[3], (embed_dim,), jnp.float32),
        "wv": 0.05 * jax.random.normal(ks[4], (img_dim, embed_dim), jnp.float32),
        "bv": 0.05 * jax.random.normal(ks[5], (embed_dim,), jnp.float32),
        "wo": 0.05 * jax.random.normal(ks[6], (embed_dim, img_dim), jnp.float32),
        "bo": 0.05 * jax.random.normal(ks[7], (img_dim,), jnp.float32),
    }

    text_feature = jax.random.normal(ks[8], (B, text_dim), jnp.float32)
    image_feature = jax.random.normal(ks[9], (B, img_dim, H, W), jnp.float32)

    out = cross_attention_block(text_feature, image_feature, params)
    out = jax.block_until_ready(out)

    ref = reference_forward(text_feature, image_feature, params)
    np.testing.assert_allclose(np.asarray(out), np.asarray(ref),
                               rtol=1e-5, atol=1e-5)
    print("KERNEL_OK")
</pallas_src>

<mosaic_0001>
module attributes {stable_mosaic.version = 11 : i64} {
  func.func @cross_attn_kernel(%arg0: memref<2x64xf32, #tpu.memory_space<vmem>>, %arg1: memref<2x32x64xf32, #tpu.memory_space<vmem>>, %arg2: memref<64x32xf32, #tpu.memory_space<vmem>>, %arg3: memref<1x32xf32, #tpu.memory_space<vmem>>, %arg4: memref<32x32xf32, #tpu.memory_space<vmem>>, %arg5: memref<1x32xf32, #tpu.memory_space<vmem>>, %arg6: memref<2x32xf32, #tpu.memory_space<vmem>>) attributes {dimension_semantics = [], scalar_prefetch = 0 : i64, scratch_operands = 0 : i64, tpu.core_type = #tpu.core_type<tc>} {
    %c0 = arith.constant 0 : index
    %c0_0 = arith.constant 0 : index
    %0 = vector.load %arg0[%c0, %c0_0] : memref<2x64xf32, #tpu.memory_space<vmem>>, vector<2x64xf32>
    %c0_1 = arith.constant 0 : index
    %c0_2 = arith.constant 0 : index
    %c0_3 = arith.constant 0 : index
    %1 = vector.load %arg1[%c0_1, %c0_2, %c0_3] : memref<2x32x64xf32, #tpu.memory_space<vmem>>, vector<2x32x64xf32>
    %c0_4 = arith.constant 0 : index
    %c0_5 = arith.constant 0 : index
    %2 = vector.load %arg2[%c0_4, %c0_5] : memref<64x32xf32, #tpu.memory_space<vmem>>, vector<64x32xf32>
    %cst = arith.constant dense<0.000000e+00> : vector<2x32xf32>
    %3 = tpu.matmul %0, %2, %cst {dimension_numbers = #tpu.dot_dimension_numbers<[1], [0], [0], [1], [0, 0, 1, 1], [], []>} : vector<2x64xf32>, vector<64x32xf32>, vector<2x32xf32> -> vector<2x32xf32>
    %c0_6 = arith.constant 0 : index
    %c0_7 = arith.constant 0 : index
    %4 = vector.load %arg3[%c0_6, %c0_7] : memref<1x32xf32, #tpu.memory_space<vmem>>, vector<1x32xf32>
    %5 = vector.broadcast %4 : vector<1x32xf32> to vector<2x32xf32>
    %6 = arith.addf %3, %5 : vector<2x32xf32>
    %7 = vector.shape_cast %6 : vector<2x32xf32> to vector<2x1x32xf32>
    "tpu.trace_start"() <{level = 10 : i32, message = "bqc,bch->bqh"}> : () -> ()
    %cst_8 = arith.constant dense<0.000000e+00> : vector<2x1x64xf32>
    %8 = tpu.matmul %7, %1, %cst_8 {dimension_numbers = #tpu.dot_dimension_numbers<[2], [1], [1], [2], [0, 0, 0, 1, 1, 2], [0], [0]>} : vector<2x1x32xf32>, vector<2x32x64xf32>, vector<2x1x64xf32> -> vector<2x1x64xf32>
    "tpu.trace_stop"() : () -> ()
    %cst_9 = arith.constant dense<0xFF800000> : vector<2x1xf32>
    %9 = vector.multi_reduction <maximumf>, %8, %cst_9 [2] : vector<2x1x64xf32> to vector<2x1xf32>
    %10 = vector.shape_cast %9 : vector<2x1xf32> to vector<2x1x1xf32>
    %11 = vector.broadcast %10 : vector<2x1x1xf32> to vector<2x1x64xf32>
    %12 = arith.subf %8, %11 : vector<2x1x64xf32>
    %13 = math.exp %12 : vector<2x1x64xf32>
    %cst_10 = arith.constant dense<0.000000e+00> : vector<2x1xf32>
    %14 = vector.multi_reduction <add>, %13, %cst_10 [2] : vector<2x1x64xf32> to vector<2x1xf32>
    %15 = vector.shape_cast %14 : vector<2x1xf32> to vector<2x1x1xf32>
    "tpu.trace_start"() <{level = 10 : i32, message = "bqh,bch->bqc"}> : () -> ()
    %cst_11 = arith.constant dense<0.000000e+00> : vector<2x1x32xf32>
    %16 = tpu.matmul %13, %1, %cst_11 {dimension_numbers = #tpu.dot_dimension_numbers<[2], [2], [1], [1], [0, 0, 0, 1, 1, 1], [0], [0]>} : vector<2x1x64xf32>, vector<2x32x64xf32>, vector<2x1x32xf32> -> vector<2x1x32xf32>
    "tpu.trace_stop"() : () -> ()
    %17 = vector.shape_cast %16 : vector<2x1x32xf32> to vector<2x32xf32>
    %18 = vector.shape_cast %15 : vector<2x1x1xf32> to vector<2x1xf32>
    %19 = tpu.reciprocal %18 : vector<2x1xf32> -> vector<2x1xf32>
    %20 = vector.broadcast %19 : vector<2x1xf32> to vector<2x32xf32>
    %21 = arith.mulf %17, %20 : vector<2x32xf32>
    %c0_12 = arith.constant 0 : index
    %c0_13 = arith.constant 0 : index
    %22 = vector.load %arg4[%c0_12, %c0_13] : memref<32x32xf32, #tpu.memory_space<vmem>>, vector<32x32xf32>
    %cst_14 = arith.constant dense<0.000000e+00> : vector<2x32xf32>
    %23 = tpu.matmul %21, %22, %cst_14 {dimension_numbers = #tpu.dot_dimension_numbers<[1], [0], [0], [1], [0, 0, 1, 1], [], []>} : vector<2x32xf32>, vector<32x32xf32>, vector<2x32xf32> -> vector<2x32xf32>
    %c0_15 = arith.constant 0 : index
    %c0_16 = arith.constant 0 : index
    %24 = vector.load %arg5[%c0_15, %c0_16] : memref<1x32xf32, #tpu.memory_space<vmem>>, vector<1x32xf32>
    %25 = vector.broadcast %24 : vector<1x32xf32> to vector<2x32xf32>
    %26 = arith.addf %23, %25 : vector<2x32xf32>
    %c0_17 = arith.constant 0 : index
    %c0_18 = arith.constant 0 : index
    %27 = vector.load %arg6[%c0_17, %c0_18] : memref<2x32xf32, #tpu.memory_space<vmem>>, vector<2x32xf32>
    tpu.vector_store %arg6[%c0_17, %c0_18], %26 {strides = array<i32>} : memref<2x32xf32, #tpu.memory_space<vmem>>, vector<2x32xf32>,
    return
  }
}

</mosaic_0001>

<llo_original>
// kernel: tpu_custom_call.1
$region0: #{tpu_custom_call.1}
  #allocation0 [shape = 'u32[]', space=smem, size = 0x4, offset = 0x4, fixed_abs, tag = 'smem constant byte address 0x4 - core index']
  #allocation1 [shape = 'u32[144,128]{1,0:T(1,128)}', space=vmem, size = 0x12000, scoped, tag = 'internal scratch']
  %s0 = inlined_call_operand.hbm [shape: f32[2,64], index: 0, kind: input, shape index: {}]
  %s1 = inlined_call_operand.vmem [shape: f32[2,32,64], index: 1, kind: input, shape index: {}]
  %s2 = inlined_call_operand.vmem [shape: f32[64,32], index: 2, kind: input, shape index: {}]
  %s3 = inlined_call_operand.vmem [shape: f32[1,32], index: 3, kind: input, shape index: {}]
  %s4 = inlined_call_operand.vmem [shape: f32[32,32], index: 4, kind: input, shape index: {}]
  %s5 = inlined_call_operand.vmem [shape: f32[1,32], index: 5, kind: input, shape index: {}]
  %s6 = inlined_call_operand.hbm [shape: f32[2,32], index: 6, kind: output, shape index: {}]
  %s7 = sld [smem:[#allocation0]]
  $region38: #{tpu_custom_call.1} parent=0
    _
  %s9 = ssub.s32 1, %s7
  %s10 = scalar_select 0, %s9, %s7
  $region1: #{tpu_custom_call.1} parent=0
    #allocation2 [shape = 'u8[1024]{0}', space=vmem, size = 0x400, scoped, tag = 'input window, operand 0, single buffered']
    #allocation3 [shape = 's32[1]{0}', space=sflag, size = 0x4, scoped, tag = 'scoped memory for tpu_custom_call.1']
    #allocation4 [shape = 's32[1]{0}', space=sflag, size = 0x4, scoped, tag = 'scoped memory for tpu_custom_call.1']
    #allocation5 [shape = 'u8[1024]{0}', space=vmem, size = 0x400, scoped, tag = 'output window, operand 0, single buffered']
    %11 = vsyncpa [#allocation3], 0
    %12 = vsyncpa [#allocation4], 0
    // Predicated region
    $region2: #{tpu_custom_call.1} parent=1 // pred_check
      _
    $region3: #{tpu_custom_call.1} parent=1 // pred_check_branch
      %14 = sbr.rel (0) target = $region5
    $region4: #{tpu_custom_call.1} parent=1 // pred_region
      %s16 = ssub.s32 32, 32
      %17 = vsyncadd [#allocation3], %s16
      %s19 = sshll.u32 [#allocation2], 4
      %s20 = int_to_ptr.vmem [resolvable:$true] %s19
      %22 = dma.hbm_to_vmem [thread:$0]  %s0, 32, %s20, [#allocation3]
    $region5: #{tpu_custom_call.1} parent=1 // pred_fallthru
      _
    // Predicated region
    $region6: #{tpu_custom_call.1} parent=1 // pred_check
      _
    $region7: #{tpu_custom_call.1} parent=1 // pred_check_branch
      %24 = sbr.rel (0) target = $region9
    $region8: #{tpu_custom_call.1} parent=1 // pred_region
      _
    $region9: #{tpu_custom_call.1} parent=1 // pred_fallthru
      _
    // Predicated region
    $region10: #{tpu_custom_call.1} parent=1 // pred_check
      _
    $region11: #{tpu_custom_call.1} parent=1 // pred_check_branch
      %26 = sbr.rel (0) target = $region13
    $region12: #{tpu_custom_call.1} parent=1 // pred_region
      _
    $region13: #{tpu_custom_call.1} parent=1 // pred_fallthru
      _
    // Predicated region
    $region14: #{tpu_custom_call.1} parent=1 // pred_check
      _
    $region15: #{tpu_custom_call.1} parent=1 // pred_check_branch
      %28 = sbr.rel (0) target = $region17
    $region16: #{tpu_custom_call.1} parent=1 // pred_region
      _
    $region17: #{tpu_custom_call.1} parent=1 // pred_fallthru
      _
    // Predicated region
    $region18: #{tpu_custom_call.1} parent=1 // pred_check
      _
    $region19: #{tpu_custom_call.1} parent=1 // pred_check_branch
      %30 = sbr.rel (0) target = $region21
    $region20: #{tpu_custom_call.1} parent=1 // pred_region
      _
    $region21: #{tpu_custom_call.1} parent=1 // pred_fallthru
      _
    // Predicated region
    $region22: #{tpu_custom_call.1} parent=1 // pred_check
      _
    $region23: #{tpu_custom_call.1} parent=1 // pred_check_branch
      %32 = sbr.rel (0) target = $region25
    $region24: #{tpu_custom_call.1} parent=1 // pred_region
      _
    $region25: #{tpu_custom_call.1} parent=1 // pred_fallthru
      _
    // Predicated region
    $region26: #{tpu_custom_call.1} parent=1 // pred_check
      _
    $region27: #{tpu_custom_call.1} parent=1 // pred_check_branch
      %34 = sbr.rel (0) target = $region29
    $region28: #{tpu_custom_call.1} parent=1 // pred_region
      %35 = dma.done [#allocation3], 32
    $region29: #{tpu_custom_call.1} parent=1 // pred_fallthru
      _
    %v36 = vld [vmem:[#allocation2] sm:$0x3]
    %v37 = vld [vmem:[%s1] sm:$0xff]
    %v38 = vld [vmem:[%s1 + $0x8] sm:$0xff]
    %v39 = vld [vmem:[%s1 + $0x10] sm:$0xff]
    %v40 = vld [vmem:[%s1 + $0x18] sm:$0xff]
    %v41 = vld [vmem:[%s1 + $0x20] sm:$0xff]
    %v42 = vld [vmem:[%s1 + $0x28] sm:$0xff]
    %v43 = vld [vmem:[%s1 + $0x30] sm:$0xff]
    %v44 = vld [vmem:[%s1 + $0x38] sm:$0xff]
    %v45 = vld [vmem:[%s2] sm:$0xff]
    %v46 = vld [vmem:[%s2 + $0x8] sm:$0xff]
    %v47 = vld [vmem:[%s2 + $0x10] sm:$0xff]
    %v48 = vld [vmem:[%s2 + $0x18] sm:$0xff]
    %v49 = vld [vmem:[%s2 + $0x20] sm:$0xff]
    %v50 = vld [vmem:[%s2 + $0x28] sm:$0xff]
    %v51 = vld [vmem:[%s2 + $0x30] sm:$0xff]
    %v52 = vld [vmem:[%s2 + $0x38] sm:$0xff]
    %v53 = vld [vmem:[%s3] sm:$0x1]
    %v55 = vlaneseq
    %v56 = vshrl.u32 %v55, 7
    %v57 = vsub.s32 0, %v56
    %v58 = vrot.slane %v53, %v57
    %vm60 = vcmask 523264
    %v62 = vsel %vm60, %v36, 0
    %64 = vmatprep.subr.mxu0 0.0
    %65 = vmatpush1.msra.mxu0 0.0
    %66 = vmatprep.subr.mxu0 0.0
    %67 = vmatpush1.msra.mxu0 0.0
    %68 = vmatprep.subr.mxu0 0.0
    %69 = vmatpush1.msra.mxu0 0.0
    %70 = vmatprep.subr.mxu0 0.0
    %71 = vmatpush1.msra.mxu0 0.0
    %72 = vmatprep.subr.mxu0 0.0
    %73 = vmatpush1.msra.mxu0 0.0
    %74 = vmatprep.subr.mxu0 0.0
    %75 = vmatpush1.msra.mxu0 0.0
    %76 = vmatprep.subr.mxu0 0.0
    %77 = vmatpush1.msra.mxu0 0.0
    %78 = vmatprep.subr.mxu0 0.0
    %79 = vmatpush1.msra.mxu0 0.0
    %80 = vmatprep.subr.mxu0 0.0
    %81 = vmatpush1.msra.mxu0 %v52
    %82 = vmatprep.subr.mxu0 0.0
    %83 = vmatpush1.msra.mxu0 %v51
    %84 = vmatprep.subr.mxu0 0.0
    %85 = vmatpush1.msra.mxu0 %v50
    %86 = vmatprep.subr.mxu0 0.0
    %87 = vmatpush1.msra.mxu0 %v49
    %88 = vmatprep.subr.mxu0 0.0
    %89 = vmatpush1.msra.mxu0 %v48
    %90 = vmatprep.subr.mxu0 0.0
    %91 = vmatpush1.msra.mxu0 %v47
    %92 = vmatprep.subr.mxu0 0.0
    %93 = vmatpush1.msra.mxu0 %v46
    %94 = vmatprep.subr.mxu0 0.0
    %95 = vmatpush1.msra.mxu0 %v45
    %96 = vmatprep.subr.mxu0 0.0
    %97 = vmatpush2.msra.mxu0 0.0
    %98 = vmatprep.subr.mxu0 0.0
    %99 = vmatpush2.msra.mxu0 0.0
    %100 = vmatprep.subr.mxu0 0.0
    %101 = vmatpush2.msra.mxu0 0.0
    %102 = vmatprep.subr.mxu0 0.0
    %103 = vmatpush2.msra.mxu0 0.0
    %104 = vmatprep.subr.mxu0 0.0
    %105 = vmatpush2.msra.mxu0 0.0
    %106 = vmatprep.subr.mxu0 0.0
    %107 = vmatpush2.msra.mxu0 0.0
    %108 = vmatprep.subr.mxu0 0.0
    %109 = vmatpush2.msra.mxu0 0.0
    %110 = vmatprep.subr.mxu0 0.0
    %111 = vmatpush2.msra.mxu0 0.0
    %112 = vmatprep.subr.mxu0 0.0
    %113 = vmatpush2.msra.mxu0 0.0
    %114 = vmatprep.subr.mxu0 0.0
    %115 = vmatpush2.msra.mxu0 0.0
    %116 = vmatprep.subr.mxu0 0.0
    %117 = vmatpush2.msra.mxu0 0.0
    %118 = vmatprep.subr.mxu0 0.0
    %119 = vmatpush2.msra.mxu0 0.0
    %120 = vmatprep.subr.mxu0 0.0
    %121 = vmatpush2.msra.mxu0 0.0
    %122 = vmatprep.subr.mxu0 0.0
    %123 = vmatpush2.msra.mxu0 0.0
    %124 = vmatprep.subr.mxu0 0.0
    %125 = vmatpush2.msra.mxu0 0.0
    %126 = vmatprep.subr.mxu0 0.0
    %127 = vmatpush2.msra.mxu0 0.0
    %128 = vmatprep.mubr.f32.mxu0 0.0
    %129 = vmatmul.mubr.f32.gmra.mxu0 %v62
    %v130 = vpop.f32.mrf.mxu0
    %v131 = vadd.f32 %v58, %v130
    %v132 = vpop.f32.mrf.mxu0
    %133 = vdwg.mxu0
    %v136 = vunpack.c.l.s4 1966171168
    %v137 = vunpack.c.0.s8 %v136
    %v138 = vlaneseq
    %v139 = vshrl.u32 %v138, 7
    %v140 = vsub.s32 %v137, %v139
    %v141 = vrot.slane %v131, %v140
    %v142 = vcombine.high %v141, %v141
    %v144 = vunpack.c.l.s4 1966171168
    %v145 = vunpack.c.0.s8 %v144
    %v146 = vlaneseq
    %v147 = vshrl.u32 %v146, 7
    %v148 = vsub.s32 %v145, %v147
    %v149 = vrot.slane %v141, %v148
    %v151 = vunpack.c.l.s4 1966171168
    %v152 = vunpack.c.0.s8 %v151
    %v153 = vlaneseq
    %v154 = vshrl.u32 %v153, 7
    %v155 = vsub.s32 %v152, %v154
    %v156 = vrot.slane %v142, %v155
    %vm157 = vcmask 261120
    %v158 = vsel %vm157, %v149, 0
    %160 = vmatprep.subr.mxu0 0.0
    %161 = vmatpush1.msra.mxu0 0.0
    %162 = vmatprep.subr.mxu0 0.0
    %163 = vmatpush1.msra.mxu0 0.0
    %164 = vmatprep.subr.mxu0 0.0
    %165 = vmatpush1.msra.mxu0 0.0
    %166 = vmatprep.subr.mxu0 0.0
    %167 = vmatpush1.msra.mxu0 0.0
    %168 = vmatprep.subr.mxu0 0.0
    %169 = vmatpush1.msra.mxu0 0.0
    %170 = vmatprep.subr.mxu0 0.0
    %171 = vmatpush1.msra.mxu0 0.0
    %172 = vmatprep.subr.mxu0 0.0
    %173 = vmatpush1.msra.mxu0 0.0
    %174 = vmatprep.subr.mxu0 0.0
    %175 = vmatpush1.msra.mxu0 0.0
    %176 = vmatprep.subr.mxu0 0.0
    %177 = vmatpush1.msra.mxu0 0.0
    %178 = vmatprep.subr.mxu0 0.0
    %179 = vmatpush1.msra.mxu0 0.0
    %180 = vmatprep.subr.mxu0 0.0
    %181 = vmatpush1.msra.mxu0 0.0
    %182 = vmatprep.subr.mxu0 0.0
    %183 = vmatpush1.msra.mxu0 0.0
    %184 = vmatprep.subr.mxu0 0.0
    %185 = vmatpush1.msra.mxu0 %v40
    %186 = vmatprep.subr.mxu0 0.0
    %187 = vmatpush1.msra.mxu0 %v39
    %188 = vmatprep.subr.mxu0 0.0
    %189 = vmatpush1.msra.mxu0 %v38
    %190 = vmatprep.subr.mxu0 0.0
    %191 = vmatpush1.msra.mxu0 %v37
    %192 = vmatprep.subr.mxu0 0.0
    %193 = vmatpush2.msra.mxu0 0.0
    %194 = vmatprep.subr.mxu0 0.0
    %195 = vmatpush2.msra.mxu0 0.0
    %196 = vmatprep.subr.mxu0 0.0
    %197 = vmatpush2.msra.mxu0 0.0
    %198 = vmatprep.subr.mxu0 0.0
    %199 = vmatpush2.msra.mxu0 0.0
    %200 = vmatprep.subr.mxu0 0.0
    %201 = vmatpush2.msra.mxu0 0.0
    %202 = vmatprep.subr.mxu0 0.0
    %203 = vmatpush2.msra.mxu0 0.0
    %204 = vmatprep.subr.mxu0 0.0
    %205 = vmatpush2.msra.mxu0 0.0
    %206 = vmatprep.subr.mxu0 0.0
    %207 = vmatpush2.msra.mxu0 0.0
    %208 = vmatprep.subr.mxu0 0.0
    %209 = vmatpush2.msra.mxu0 0.0
    %210 = vmatprep.subr.mxu0 0.0
    %211 = vmatpush2.msra.mxu0 0.0
    %212 = vmatprep.subr.mxu0 0.0
    %213 = vmatpush2.msra.mxu0 0.0
    %214 = vmatprep.subr.mxu0 0.0
    %215 = vmatpush2.msra.mxu0 0.0
    %216 = vmatprep.subr.mxu0 0.0
    %217 = vmatpush2.msra.mxu0 0.0
    %218 = vmatprep.subr.mxu0 0.0
    %219 = vmatpush2.msra.mxu0 0.0
    %220 = vmatprep.subr.mxu0 0.0
    %221 = vmatpush2.msra.mxu0 0.0
    %222 = vmatprep.subr.mxu0 0.0
    %223 = vmatpush2.msra.mxu0 0.0
    %224 = vmatprep.mubr.f32.mxu0 0.0
    %225 = vmatmul.mubr.f32.gmra.mxu0 %v158
    %v226 = vpop.f32.mrf.mxu0
    %v227 = vadd.f32 0.0, %v226
    %v228 = vpop.f32.mrf.mxu0
    %229 = vdwg.mxu0
    %v230 = vsel %vm157, %v156, 0
    %232 = vmatprep.subr.mxu0 0.0
    %233 = vmatpush1.msra.mxu0 0.0
    %234 = vmatprep.subr.mxu0 0.0
    %235 = vmatpush1.msra.mxu0 0.0
    %236 = vmatprep.subr.mxu0 0.0
    %237 = vmatpush1.msra.mxu0 0.0
    %238 = vmatprep.subr.mxu0 0.0
    %239 = vmatpush1.msra.mxu0 0.0
    %240 = vmatprep.subr.mxu0 0.0
    %241 = vmatpush1.msra.mxu0 0.0
    %242 = vmatprep.subr.mxu0 0.0
    %243 = vmatpush1.msra.mxu0 0.0
    %244 = vmatprep.subr.mxu0 0.0
    %245 = vmatpush1.msra.mxu0 0.0
    %246 = vmatprep.subr.mxu0 0.0
    %247 = vmatpush1.msra.mxu0 0.0
    %248 = vmatprep.subr.mxu0 0.0
    %249 = vmatpush1.msra.mxu0 0.0
    %250 = vmatprep.subr.mxu0 0.0
    %251 = vmatpush1.msra.mxu0 0.0
    %252 = vmatprep.subr.mxu0 0.0
    %253 = vmatpush1.msra.mxu0 0.0
    %254 = vmatprep.subr.mxu0 0.0
    %255 = vmatpush1.msra.mxu0 0.0
    %256 = vmatprep.subr.mxu0 0.0
    %257 = vmatpush1.msra.mxu0 %v44
    %258 = vmatprep.subr.mxu0 0.0
    %259 = vmatpush1.msra.mxu0 %v43
    %260 = vmatprep.subr.mxu0 0.0
    %261 = vmatpush1.msra.mxu0 %v42
    %262 = vmatprep.subr.mxu0 0.0
    %263 = vmatpush1.msra.mxu0 %v41
    %264 = vmatprep.subr.mxu0 0.0
    %265 = vmatpush2.msra.mxu0 0.0
    %266 = vmatprep.subr.mxu0 0.0
    %267 = vmatpush2.msra.mxu0 0.0
    %268 = vmatprep.subr.mxu0 0.0
    %269 = vmatpush2.msra.mxu0 0.0
    %270 = vmatprep.subr.mxu0 0.0
    %271 = vmatpush2.msra.mxu0 0.0
    %272 = vmatprep.subr.mxu0 0.0
    %273 = vmatpush2.msra.mxu0 0.0
    %274 = vmatprep.subr.mxu0 0.0
    %275 = vmatpush2.msra.mxu0 0.0
    %276 = vmatprep.subr.mxu0 0.0
    %277 = vmatpush2.msra.mxu0 0.0
    %278 = vmatprep.subr.mxu0 0.0
    %279 = vmatpush2.msra.mxu0 0.0
    %280 = vmatprep.subr.mxu0 0.0
    %281 = vmatpush2.msra.mxu0 0.0
    %282 = vmatprep.subr.mxu0 0.0
    %283 = vmatpush2.msra.mxu0 0.0
    %284 = vmatprep.subr.mxu0 0.0
    %285 = vmatpush2.msra.mxu0 0.0
    %286 = vmatprep.subr.mxu0 0.0
    %287 = vmatpush2.msra.mxu0 0.0
    %288 = vmatprep.subr.mxu0 0.0
    %289 = vmatpush2.msra.mxu0 0.0
    %290 = vmatprep.subr.mxu0 0.0
    %291 = vmatpush2.msra.mxu0 0.0
    %292 = vmatprep.subr.mxu0 0.0
    %293 = vmatpush2.msra.mxu0 0.0
    %294 = vmatprep.subr.mxu0 0.0
    %295 = vmatpush2.msra.mxu0 0.0
    %296 = vmatprep.mubr.f32.mxu0 0.0
    %297 = vmatmul.mubr.f32.gmra.mxu0 %v230
    %v298 = vpop.f32.mrf.mxu0
    %v299 = vadd.f32 0.0, %v298
    %v300 = vpop.f32.mrf.mxu0
    %301 = vdwg.mxu0
    %vm302 = vcmask 516096
    %v303 = vsel %vm302, %v227, -inf
    %304 = vmax.xlane.f32.xlu0 %v303
    %v305 = vpop.xlane.xlu0 %304
    %v306 = vsel %vm302, %v299, -inf
    %307 = vmax.xlane.f32.xlu0 %v306
    %v308 = vpop.xlane.xlu0 %307
    %v309 = vsub.f32 %v227, %v305
    %v310 = vsub.f32 %v299, %v308
    %v311 = vmul.f32 %v309, 1.442695
    %v312 = vpow.pop %v311
    %v313 = vmul.f32 %v310, 1.442695
    %v314 = vpow.pop %v313
    %v315 = vsel %vm302, %v312, 0.0
    %316 = vadd.xlane.f32.xlu0 %v315
    %v317 = vpop.xlane.xlu0 %316
    %v318 = vsel %vm302, %v314, 0.0
    %319 = vadd.xlane.f32.xlu0 %v318
    %v320 = vpop.xlane.xlu0 %319
    %v322 = vsel %vm60, %v312, 0
    %v325 = vsel %vm60, %v37, 0
    %v328 = vsel %vm60, %v38, 0
    %v331 = vsel %vm60, %v39, 0
    %v334 = vsel %vm60, %v40, 0
    %336 = vmatprep.subr.mxu0 0.0
    %337 = vmatpush1.xpose.msra.mxu0 0.0
    %338 = vmatprep.subr.mxu0 0.0
    %339 = vmatpush1.xpose.msra.mxu0 0.0
    %340 = vmatprep.subr.mxu0 0.0
    %341 = vmatpush1.xpose.msra.mxu0 0.0
    %342 = vmatprep.subr.mxu0 0.0
    %343 = vmatpush1.xpose.msra.mxu0 0.0
    %344 = vmatprep.subr.mxu0 0.0
    %345 = vmatpush1.xpose.msra.mxu0 0.0
    %346 = vmatprep.subr.mxu0 0.0
    %347 = vmatpush1.xpose.msra.mxu0 0.0
    %348 = vmatprep.subr.mxu0 0.0
    %349 = vmatpush1.xpose.msra.mxu0 0.0
    %350 = vmatprep.subr.mxu0 0.0
    %351 = vmatpush1.xpose.msra.mxu0 0.0
    %352 = vmatprep.subr.mxu0 0.0
    %353 = vmatpush1.xpose.msra.mxu0 0.0
    %354 = vmatprep.subr.mxu0 0.0
    %355 = vmatpush1.xpose.msra.mxu0 0.0
    %356 = vmatprep.subr.mxu0 0.0
    %357 = vmatpush1.xpose.msra.mxu0 0.0
    %358 = vmatprep.subr.mxu0 0.0
    %359 = vmatpush1.xpose.msra.mxu0 0.0
    %360 = vmatprep.subr.mxu0 0.0
    %361 = vmatpush1.xpose.msra.mxu0 %v334
    %362 = vmatprep.subr.mxu0 0.0
    %363 = vmatpush1.xpose.msra.mxu0 %v331
    %364 = vmatprep.subr.mxu0 0.0
    %365 = vmatpush1.xpose.msra.mxu0 %v328
    %366 = vmatprep.subr.mxu0 0.0
    %367 = vmatpush1.xpose.msra.mxu0 %v325
    %368 = vmatprep.subr.mxu0 0.0
    %369 = vmatpush2.xpose.msra.mxu0 0.0
    %370 = vmatprep.subr.mxu0 0.0
    %371 = vmatpush2.xpose.msra.mxu0 0.0
    %372 = vmatprep.subr.mxu0 0.0
    %373 = vmatpush2.xpose.msra.mxu0 0.0
    %374 = vmatprep.subr.mxu0 0.0
    %375 = vmatpush2.xpose.msra.mxu0 0.0
    %376 = vmatprep.subr.mxu0 0.0
    %377 = vmatpush2.xpose.msra.mxu0 0.0
    %378 = vmatprep.subr.mxu0 0.0
    %379 = vmatpush2.xpose.msra.mxu0 0.0
    %380 = vmatprep.subr.mxu0 0.0
    %381 = vmatpush2.xpose.msra.mxu0 0.0
    %382 = vmatprep.subr.mxu0 0.0
    %383 = vmatpush2.xpose.msra.mxu0 0.0
    %384 = vmatprep.subr.mxu0 0.0
    %385 = vmatpush2.xpose.msra.mxu0 0.0
    %386 = vmatprep.subr.mxu0 0.0
    %387 = vmatpush2.xpose.msra.mxu0 0.0
    %388 = vmatprep.subr.mxu0 0.0
    %389 = vmatpush2.xpose.msra.mxu0 0.0
    %390 = vmatprep.subr.mxu0 0.0
    %391 = vmatpush2.xpose.msra.mxu0 0.0
    %392 = vmatprep.subr.mxu0 0.0
    %393 = vmatpush2.xpose.msra.mxu0 0.0
    %394 = vmatprep.subr.mxu0 0.0
    %395 = vmatpush2.xpose.msra.mxu0 0.0
    %396 = vmatprep.subr.mxu0 0.0
    %397 = vmatpush2.xpose.msra.mxu0 0.0
    %398 = vmatprep.subr.mxu0 0.0
    %399 = vmatpush2.xpose.msra.mxu0 0.0
    %400 = vmatprep.mubr.f32.mxu0 0.0
    %401 = vmatmul.mubr.f32.gmra.mxu0 %v322
    %v402 = vpop.f32.mrf.mxu0
    %v403 = vadd.f32 0.0, %v402
    %v404 = vpop.f32.mrf.mxu0
    %405 = vdwg.mxu0
    %v407 = vsel %vm60, %v314, 0
    %v410 = vsel %vm60, %v41, 0
    %v413 = vsel %vm60, %v42, 0
    %v416 = vsel %vm60, %v43, 0
    %v419 = vsel %vm60, %v44, 0
    %421 = vmatprep.subr.mxu0 0.0
    %422 = vmatpush1.xpose.msra.mxu0 0.0
    %423 = vmatprep.subr.mxu0 0.0
    %424 = vmatpush1.xpose.msra.mxu0 0.0
    %425 = vmatprep.subr.mxu0 0.0
    %426 = vmatpush1.xpose.msra.mxu0 0.0
    %427 = vmatprep.subr.mxu0 0.0
    %428 = vmatpush1.xpose.msra.mxu0 0.0
    %429 = vmatprep.subr.mxu0 0.0
    %430 = vmatpush1.xpose.msra.mxu0 0.0
    %431 = vmatprep.subr.mxu0 0.0
    %432 = vmatpush1.xpose.msra.mxu0 0.0
    %433 = vmatprep.subr.mxu0 0.0
    %434 = vmatpush1.xpose.msra.mxu0 0.0
    %435 = vmatprep.subr.mxu0 0.0
    %436 = vmatpush1.xpose.msra.mxu0 0.0
    %437 = vmatprep.subr.mxu0 0.0
    %438 = vmatpush1.xpose.msra.mxu0 0.0
    %439 = vmatprep.subr.mxu0 0.0
    %440 = vmatpush1.xpose.msra.mxu0 0.0
    %441 = vmatprep.subr.mxu0 0.0
    %442 = vmatpush1.xpose.msra.mxu0 0.0
    %443 = vmatprep.subr.mxu0 0.0
    %444 = vmatpush1.xpose.msra.mxu0 0.0
    %445 = vmatprep.subr.mxu0 0.0
    %446 = vmatpush1.xpose.msra.mxu0 %v419
    %447 = vmatprep.subr.mxu0 0.0
    %448 = vmatpush1.xpose.msra.mxu0 %v416
    %449 = vmatprep.subr.mxu0 0.0
    %450 = vmatpush1.xpose.msra.mxu0 %v413
    %451 = vmatprep.subr.mxu0 0.0
    %452 = vmatpush1.xpose.msra.mxu0 %v410
    %453 = vmatprep.subr.mxu0 0.0
    %454 = vmatpush2.xpose.msra.mxu0 0.0
    %455 = vmatprep.subr.mxu0 0.0
    %456 = vmatpush2.xpose.msra.mxu0 0.0
    %457 = vmatprep.subr.mxu0 0.0
    %458 = vmatpush2.xpose.msra.mxu0 0.0
    %459 = vmatprep.subr.mxu0 0.0
    %460 = vmatpush2.xpose.msra.mxu0 0.0
    %461 = vmatprep.subr.mxu0 0.0
    %462 = vmatpush2.xpose.msra.mxu0 0.0
    %463 = vmatprep.subr.mxu0 0.0
    %464 = vmatpush2.xpose.msra.mxu0 0.0
    %465 = vmatprep.subr.mxu0 0.0
    %466 = vmatpush2.xpose.msra.mxu0 0.0
    %467 = vmatprep.subr.mxu0 0.0
    %468 = vmatpush2.xpose.msra.mxu0 0.0
    %469 = vmatprep.subr.mxu0 0.0
    %470 = vmatpush2.xpose.msra.mxu0 0.0
    %471 = vmatprep.subr.mxu0 0.0
    %472 = vmatpush2.xpose.msra.mxu0 0.0
    %473 = vmatprep.subr.mxu0 0.0
    %474 = vmatpush2.xpose.msra.mxu0 0.0
    %475 = vmatprep.subr.mxu0 0.0
    %476 = vmatpush2.xpose.msra.mxu0 0.0
    %477 = vmatprep.subr.mxu0 0.0
    %478 = vmatpush2.xpose.msra.mxu0 0.0
    %479 = vmatprep.subr.mxu0 0.0
    %480 = vmatpush2.xpose.msra.mxu0 0.0
    %481 = vmatprep.subr.mxu0 0.0
    %482 = vmatpush2.xpose.msra.mxu0 0.0
    %483 = vmatprep.subr.mxu0 0.0
    %484 = vmatpush2.xpose.msra.mxu0 0.0
    %485 = vmatprep.mubr.f32.mxu0 0.0
    %486 = vmatmul.mubr.f32.gmra.mxu0 %v407
    %v487 = vpop.f32.mrf.mxu0
    %v488 = vadd.f32 0.0, %v487
    %v489 = vpop.f32.mrf.mxu0
    %490 = vdwg.mxu0
    %v491 = vrcp.pop %v317
    %v492 = vrcp.pop %v320
    %v493 = vlaneseq
    %v494 = vshrl.u32 %v493, 7
    %v495 = vsub.s32 0, %v494
    %v496 = vrot.slane %v491, %v495
    %v497 = vlaneseq
    %v498 = vshrl.u32 %v497, 7
    %v499 = vsub.s32 0, %v498
    %v500 = vrot.slane %v492, %v499
    %v501 = vmul.f32 %v403, %v496
    %v502 = vmul.f32 %v488, %v500
    %v503 = vld [vmem:[%s4] sm:$0xff]
    %v504 = vld [vmem:[%s4 + $0x8] sm:$0xff]
    %v505 = vld [vmem:[%s4 + $0x10] sm:$0xff]
    %v506 = vld [vmem:[%s4 + $0x18] sm:$0xff]
    %v507 = vld [vmem:[%s5] sm:$0x1]
    %v509 = vlaneseq
    %v510 = vshrl.u32 %v509, 7
    %v511 = vsub.s32 0, %v510
    %v512 = vrot.slane %v507, %v511
    %v516 = vrot.slane %v502, 7
    %vm517 = vcmask 1041409
    %v518 = vsel %vm517, %v516, %v501
    %v519 = vsel %vm157, %v518, 0
    %521 = vmatprep.subr.mxu0 0.0
    %522 = vmatpush1.msra.mxu0 0.0
    %523 = vmatprep.subr.mxu0 0.0
    %524 = vmatpush1.msra.mxu0 0.0
    %525 = vmatprep.subr.mxu0 0.0
    %526 = vmatpush1.msra.mxu0 0.0
    %527 = vmatprep.subr.mxu0 0.0
    %528 = vmatpush1.msra.mxu0 0.0
    %529 = vmatprep.subr.mxu0 0.0
    %530 = vmatpush1.msra.mxu0 0.0
    %531 = vmatprep.subr.mxu0 0.0
    %532 = vmatpush1.msra.mxu0 0.0
    %533 = vmatprep.subr.mxu0 0.0
    %534 = vmatpush1.msra.mxu0 0.0
    %535 = vmatprep.subr.mxu0 0.0
    %536 = vmatpush1.msra.mxu0 0.0
    %537 = vmatprep.subr.mxu0 0.0
    %538 = vmatpush1.msra.mxu0 0.0
    %539 = vmatprep.subr.mxu0 0.0
    %540 = vmatpush1.msra.mxu0 0.0
    %541 = vmatprep.subr.mxu0 0.0
    %542 = vmatpush1.msra.mxu0 0.0
    %543 = vmatprep.subr.mxu0 0.0
    %544 = vmatpush1.msra.mxu0 0.0
    %545 = vmatprep.subr.mxu0 0.0
    %546 = vmatpush1.msra.mxu0 %v506
    %547 = vmatprep.subr.mxu0 0.0
    %548 = vmatpush1.msra.mxu0 %v505
    %549 = vmatprep.subr.mxu0 0.0
    %550 = vmatpush1.msra.mxu0 %v504
    %551 = vmatprep.subr.mxu0 0.0
    %552 = vmatpush1.msra.mxu0 %v503
    %553 = vmatprep.subr.mxu0 0.0
    %554 = vmatpush2.msra.mxu0 0.0
    %555 = vmatprep.subr.mxu0 0.0
    %556 = vmatpush2.msra.mxu0 0.0
    %557 = vmatprep.subr.mxu0 0.0
    %558 = vmatpush2.msra.mxu0 0.0
    %559 = vmatprep.subr.mxu0 0.0
    %560 = vmatpush2.msra.mxu0 0.0
    %561 = vmatprep.subr.mxu0 0.0
    %562 = vmatpush2.msra.mxu0 0.0
    %563 = vmatprep.subr.mxu0 0.0
    %564 = vmatpush2.msra.mxu0 0.0
    %565 = vmatprep.subr.mxu0 0.0
    %566 = vmatpush2.msra.mxu0 0.0
    %567 = vmatprep.subr.mxu0 0.0
    %568 = vmatpush2.msra.mxu0 0.0
    %569 = vmatprep.subr.mxu0 0.0
    %570 = vmatpush2.msra.mxu0 0.0
    %571 = vmatprep.subr.mxu0 0.0
    %572 = vmatpush2.msra.mxu0 0.0
    %573 = vmatprep.subr.mxu0 0.0
    %574 = vmatpush2.msra.mxu0 0.0
    %575 = vmatprep.subr.mxu0 0.0
    %576 = vmatpush2.msra.mxu0 0.0
    %577 = vmatprep.subr.mxu0 0.0
    %578 = vmatpush2.msra.mxu0 0.0
    %579 = vmatprep.subr.mxu0 0.0
    %580 = vmatpush2.msra.mxu0 0.0
    %581 = vmatprep.subr.mxu0 0.0
    %582 = vmatpush2.msra.mxu0 0.0
    %583 = vmatprep.subr.mxu0 0.0
    %584 = vmatpush2.msra.mxu0 0.0
    %585 = vmatprep.mubr.f32.mxu0 0.0
    %586 = vmatmul.mubr.f32.gmra.mxu0 %v519
    %v587 = vpop.f32.mrf.mxu0
    %v588 = vadd.f32 %v512, %v587
    %v589 = vpop.f32.mrf.mxu0
    %590 = vdwg.mxu0
    %vm591 = vcmask 254976
    %592 = vst.msk [vmem:[#allocation5] sm:$0x3] %vm591, %v588
    // Predicated region
    $region30: #{tpu_custom_call.1} parent=1 // pred_check
      _
    $region31: #{tpu_custom_call.1} parent=1 // pred_check_branch
      %594 = sbr.rel (0) target = $region33
    $region32: #{tpu_custom_call.1} parent=1 // pred_region
      %s596 = ssub.s32 32, 32
      %597 = vsyncadd [#allocation4], %s596
      %s599 = sshll.u32 [#allocation5], 4
      %s600 = int_to_ptr.vmem [resolvable:$true] %s599
      %602 = dma.vmem_to_hbm [thread:$0]  %s600, 32, %s6, [#allocation4]
    $region33: #{tpu_custom_call.1} parent=1 // pred_fallthru
      _
    // Predicated region
    $region34: #{tpu_custom_call.1} parent=1 // pred_check
      _
    $region35: #{tpu_custom_call.1} parent=1 // pred_check_branch
      %604 = sbr.rel (0) target = $region37
    $region36: #{tpu_custom_call.1} parent=1 // pred_region
      %605 = dma.done [#allocation4], 32
    $region37: #{tpu_custom_call.1} parent=1 // pred_fallthru
      _
    %606 = vsyncpa [#allocation3], 1
    %607 = vsyncpa [#allocation4], 1

</llo_original>
